<compile_context>
chip_gen: v7x
topology: tpu7x:2x2x1
jax: 0.10.0
libtpu: 0.0.40
codegen_flags: <defaults>
</compile_context>

<pallas_src>
import functools

import jax
import jax.numpy as jnp
from jax import lax
from jax.experimental import pallas as pl
from jax.experimental.pallas import tpu as pltpu


def _lim_kernel(a_ref, b_ref, ma_ref, mb_ref, *, approx_recip=False):
    a = a_ref[...]                                    # (Bblk, La, D), input dtype
    b = b_ref[...]                                    # (Bblk, Lb, D), input dtype
    _, La, D = a.shape
    _, Lb, _ = b.shape

    low_prec = a.dtype in (jnp.bfloat16, jnp.float16)
    mm_dt = a.dtype if low_prec else jnp.float32      # probability operand dtype

    def recip(x):
        return pl.reciprocal(x, approx=True) if approx_recip else 1.0 / x

    # e[n, l, m] = sum_d a[n, l, d] * b[n, m, d]   (no b transpose).
    # Native-dtype operands feed the MXU at full bf16 rate; f32 accumulation.
    e = lax.dot_general(
        a, b,
        dimension_numbers=(((2,), (2,)), ((0,), (0,))),
        preferred_element_type=jnp.float32,
    )                                                 # (Bblk, La, Lb) f32

    # ---- a-side: softmax over Lb (torch dim=2), normalization deferred to the
    # (La, D) result instead of the (La, Lb) probability matrix. ----
    p_row = jnp.exp(e - jnp.max(e, axis=2, keepdims=True))       # (Bblk, La, Lb)
    row_sum = jnp.sum(p_row, axis=2, keepdims=True)               # (Bblk, La, 1)
    at_un = lax.dot_general(
        p_row.astype(mm_dt), b,
        dimension_numbers=(((2,), (1,)), ((0,), (0,))),
        preferred_element_type=jnp.float32,
    )                                                 # (Bblk, La, D) f32
    a_tilde = (at_un * recip(row_sum)).astype(ma_ref.dtype)

    # Write the a-side output before starting b-side work (bounds live ranges).
    # All concat pieces are already in the output dtype — no 4D-wide f32 temp.
    ma_ref[...] = jnp.concatenate(
        [a, a_tilde, a - a_tilde, a * a_tilde], axis=-1)

    # ---- b-side: softmax over La (torch dim=1), no score-matrix transpose. ----
    p_col = jnp.exp(e - jnp.max(e, axis=1, keepdims=True))       # (Bblk, La, Lb)
    col_sum = jnp.sum(p_col, axis=1, keepdims=True)               # (Bblk, 1, Lb)

    # Defer column normalization onto the (Lb, D) result when that is cheaper
    # than scaling the full (La, Lb) probability matrix.
    defer_col = La * Lb > Lb * D
    if not defer_col:
        p_col = p_col * recip(col_sum)

    # b_tilde[n, m, d] = sum_l p_col[n, l, m] * a[n, l, d]   (contract La)
    bt = lax.dot_general(
        p_col.astype(mm_dt), a,
        dimension_numbers=(((1,), (1,)), ((0,), (0,))),
        preferred_element_type=jnp.float32,
    )                                                 # (Bblk, Lb, D) f32
    if defer_col:
        # (Bblk, 1, Lb) -> (Bblk, Lb, 1): one small XLU relayout; replaces an
        # La*Lb-wide VPU multiply with an Lb*D-wide one.
        bt = bt * jnp.swapaxes(recip(col_sum), 1, 2)
    b_tilde = bt.astype(mb_ref.dtype)

    mb_ref[...] = jnp.concatenate(
        [b, b_tilde, b - b_tilde, b * b_tilde], axis=-1)


def _vmem_budgets(vmem_limit_bytes=None):
    """Generation-aware VMEM limits: v7x has 64 MiB/TC, v5e/v6e have 128 MiB."""
    if vmem_limit_bytes is None:
        try:
            cap = int(pltpu.get_tpu_info().vmem_capacity_bytes)
        except Exception:
            cap = 64 * 1024 * 1024          # conservative: assume v7x
        vmem_limit_bytes = int(cap * 0.6)   # headroom for Mosaic internal scratch
    return vmem_limit_bytes, vmem_limit_bytes // 2


def _pick_batch_block(B, La, Lb, D, itemsize, budget_bytes):
    """Largest divisor of B whose per-step footprint fits the budget, while
    keeping >= 2 grid steps (megacore sharding on v7x, pipelining everywhere)
    and preferring an even number of steps."""
    per_elem = (
        2 * (La + Lb) * D * itemsize            # double-buffered input tiles
        + 2 * (La + Lb) * 4 * D * itemsize      # double-buffered output tiles
        + 3 * La * Lb * 4                       # f32 scores + two exp'd prob mats
        + 6 * (La + Lb) * D * 4                 # f32 attention / epilogue temps
    )
    fitting = []
    for cand in range(1, B + 1):
        if B % cand:
            continue
        if B >= 2 and B // cand < 2:            # keep at least 2 grid steps
            continue
        if cand * per_elem <= budget_bytes:
            fitting.append(cand)
    if not fitting:
        return 1
    even = [c for c in fitting if (B // c) % 2 == 0]
    return max(even) if even else max(fitting)


def local_inference_modeling(a_bar, b_bar, *, batch_block=None,
                             vmem_limit_bytes=None, approx_reciprocal=False,
                             pad_feature_dim=True):
    B, La, D = a_bar.shape
    Bb, Lb, Db = b_bar.shape
    assert B == Bb and D == Db
    assert a_bar.dtype == b_bar.dtype

    vmem_limit, picker_budget = _vmem_budgets(vmem_limit_bytes)

    # Lane-dense output stores: make 4*D a multiple of 128 by zero-padding D.
    # Zero feature columns contribute nothing to e / a~ / b~, so the first D
    # columns of every concat piece are unchanged; padding is stripped below.
    pad = (-D) % 32 if pad_feature_dim else 0
    if pad:
        a_in = jnp.pad(a_bar, ((0, 0), (0, 0), (0, pad)))
        b_in = jnp.pad(b_bar, ((0, 0), (0, 0), (0, pad)))
    else:
        a_in, b_in = a_bar, b_bar
    Dp = D + pad

    if batch_block is None:
        batch_block = _pick_batch_block(B, La, Lb, Dp, a_bar.dtype.itemsize,
                                        picker_budget)
    assert B % batch_block == 0
    grid = (B // batch_block,)

    kernel = functools.partial(_lim_kernel, approx_recip=approx_reciprocal)

    grid_spec = pltpu.PrefetchScalarGridSpec(
        num_scalar_prefetch=0,
        grid=grid,
        in_specs=[
            pl.BlockSpec((batch_block, La, Dp), lambda i: (i, 0, 0)),
            pl.BlockSpec((batch_block, Lb, Dp), lambda i: (i, 0, 0)),
        ],
        out_specs=[
            pl.BlockSpec((batch_block, La, 4 * Dp), lambda i: (i, 0, 0)),
            pl.BlockSpec((batch_block, Lb, 4 * Dp), lambda i: (i, 0, 0)),
        ],
    )

    m_a, m_b = pl.pallas_call(
        kernel,
        out_shape=(
            jax.ShapeDtypeStruct((B, La, 4 * Dp), a_bar.dtype),
            jax.ShapeDtypeStruct((B, Lb, 4 * Dp), b_bar.dtype),
        ),
        grid_spec=grid_spec,
        compiler_params=pltpu.CompilerParams(
            dimension_semantics=("parallel",),
            vmem_limit_bytes=vmem_limit,
        ),
    )(a_in, b_in)

    if pad:
        m_a = m_a.reshape(B, La, 4, Dp)[..., :D].reshape(B, La, 4 * D)
        m_b = m_b.reshape(B, Lb, 4, Dp)[..., :D].reshape(B, Lb, 4 * D)
    return m_a, m_b


def _reference(a_bar, b_bar):
    e = jnp.einsum("bld,bmd->blm", a_bar, b_bar)
    p_row = jax.nn.softmax(e, axis=2)          # softmax_col in the torch code
    p_col = jax.nn.softmax(e, axis=1)          # softmax_row in the torch code
    a_tilde = jnp.einsum("blm,bmd->bld", p_row, b_bar)
    b_tilde = jnp.einsum("blm,bld->bmd", p_col, a_bar)
    m_a = jnp.concatenate([a_bar, a_tilde, a_bar - a_tilde, a_bar * a_tilde], -1)
    m_b = jnp.concatenate([b_bar, b_tilde, b_bar - b_tilde, b_bar * b_tilde], -1)
    return m_a, m_b


if __name__ == "__main__":
    key = jax.random.PRNGKey(0)
    ka, kb = jax.random.split(key)
    B, La, Lb, D = 2, 8, 16, 32
    a_bar = jax.random.normal(ka, (B, La, D), dtype=jnp.float32)
    b_bar = jax.random.normal(kb, (B, Lb, D), dtype=jnp.float32)

    m_a, m_b = local_inference_modeling(a_bar, b_bar)
    jax.block_until_ready((m_a, m_b))

    ref_a, ref_b = _reference(a_bar, b_bar)
    assert m_a.shape == (B, La, 4 * D) and m_b.shape == (B, Lb, 4 * D)
    assert jnp.allclose(m_a, ref_a, atol=1e-4, rtol=1e-4), \
        float(jnp.max(jnp.abs(m_a - ref_a)))
    assert jnp.allclose(m_b, ref_b, atol=1e-4, rtol=1e-4), \
        float(jnp.max(jnp.abs(m_b - ref_b)))

    print("KERNEL_OK")
</pallas_src>

<mosaic_0001>
module attributes {stable_mosaic.version = 11 : i64} {
  func.func @_lim_kernel(%arg0: i32, %arg1: memref<1x8x32xf32, #tpu.memory_space<vmem>>, %arg2: memref<1x16x32xf32, #tpu.memory_space<vmem>>, %arg3: memref<1x8x128xf32, #tpu.memory_space<vmem>>, %arg4: memref<1x16x128xf32, #tpu.memory_space<vmem>>) attributes {dimension_semantics = [#tpu.dimension_semantics<parallel>], iteration_bounds = array<i64: 2>, scalar_prefetch = 0 : i64, scratch_operands = 0 : i64, tpu.core_type = #tpu.core_type<tc>, window_params = [{transform_indices = @transform_0, window_bounds = array<i64: 1, 8, 32>}, {transform_indices = @transform_1, window_bounds = array<i64: 1, 16, 32>}, {transform_indices = @transform_2, window_bounds = array<i64: 1, 8, 128>}, {transform_indices = @transform_3, window_bounds = array<i64: 1, 16, 128>}]} {
    %c0 = arith.constant 0 : index
    %c0_0 = arith.constant 0 : index
    %c0_1 = arith.constant 0 : index
    %0 = vector.load %arg1[%c0, %c0_0, %c0_1] : memref<1x8x32xf32, #tpu.memory_space<vmem>>, vector<1x8x32xf32>
    %c0_2 = arith.constant 0 : index
    %c0_3 = arith.constant 0 : index
    %c0_4 = arith.constant 0 : index
    %1 = vector.load %arg2[%c0_2, %c0_3, %c0_4] : memref<1x16x32xf32, #tpu.memory_space<vmem>>, vector<1x16x32xf32>
    %cst = arith.constant dense<0.000000e+00> : vector<1x8x16xf32>
    %2 = tpu.matmul %0, %1, %cst {dimension_numbers = #tpu.dot_dimension_numbers<[2], [2], [1], [1], [0, 0, 0, 1, 1, 1], [0], [0]>} : vector<1x8x32xf32>, vector<1x16x32xf32>, vector<1x8x16xf32> -> vector<1x8x16xf32>
    %cst_5 = arith.constant dense<0xFF800000> : vector<1x8xf32>
    %3 = vector.multi_reduction <maximumf>, %2, %cst_5 [2] : vector<1x8x16xf32> to vector<1x8xf32>
    %4 = vector.shape_cast %3 : vector<1x8xf32> to vector<1x8x1xf32>
    %5 = vector.broadcast %4 : vector<1x8x1xf32> to vector<1x8x16xf32>
    %6 = arith.subf %2, %5 : vector<1x8x16xf32>
    %7 = math.exp %6 : vector<1x8x16xf32>
    %cst_6 = arith.constant dense<0.000000e+00> : vector<1x8xf32>
    %8 = vector.multi_reduction <add>, %7, %cst_6 [2] : vector<1x8x16xf32> to vector<1x8xf32>
    %9 = vector.shape_cast %8 : vector<1x8xf32> to vector<1x8x1xf32>
    %cst_7 = arith.constant dense<0.000000e+00> : vector<1x8x32xf32>
    %10 = tpu.matmul %7, %1, %cst_7 {dimension_numbers = #tpu.dot_dimension_numbers<[2], [1], [1], [2], [0, 0, 0, 1, 1, 2], [0], [0]>} : vector<1x8x16xf32>, vector<1x16x32xf32>, vector<1x8x32xf32> -> vector<1x8x32xf32>
    %cst_8 = arith.constant 1.000000e+00 : f32
    %11 = vector.broadcast %cst_8 : f32 to vector<1x8x1xf32>
    %12 = arith.divf %11, %9 : vector<1x8x1xf32>
    %13 = vector.broadcast %12 : vector<1x8x1xf32> to vector<1x8x32xf32>
    %14 = arith.mulf %10, %13 : vector<1x8x32xf32>
    %15 = arith.subf %0, %14 : vector<1x8x32xf32>
    %16 = arith.mulf %0, %14 : vector<1x8x32xf32>
    %17 = tpu.concatenate %0, %14, %15, %16 in 2 : vector<1x8x32xf32>, vector<1x8x32xf32>, vector<1x8x32xf32>, vector<1x8x32xf32> -> vector<1x8x128xf32>
    %c0_9 = arith.constant 0 : index
    %c0_10 = arith.constant 0 : index
    %c0_11 = arith.constant 0 : index
    %18 = vector.load %arg3[%c0_9, %c0_10, %c0_11] : memref<1x8x128xf32, #tpu.memory_space<vmem>>, vector<1x8x128xf32>
    tpu.vector_store %arg3[%c0_9, %c0_10, %c0_11], %17 {strides = array<i32>} : memref<1x8x128xf32, #tpu.memory_space<vmem>>, vector<1x8x128xf32>,
    %cst_12 = arith.constant dense<0xFF800000> : vector<1x16xf32>
    %19 = vector.multi_reduction <maximumf>, %2, %cst_12 [1] : vector<1x8x16xf32> to vector<1x16xf32>
    %20 = vector.shape_cast %19 : vector<1x16xf32> to vector<1x1x16xf32>
    %21 = vector.broadcast %20 : vector<1x1x16xf32> to vector<1x8x16xf32>
    %22 = arith.subf %2, %21 : vector<1x8x16xf32>
    %23 = math.exp %22 : vector<1x8x16xf32>
    %cst_13 = arith.constant dense<0.000000e+00> : vector<1x16xf32>
    %24 = vector.multi_reduction <add>, %23, %cst_13 [1] : vector<1x8x16xf32> to vector<1x16xf32>
    %25 = vector.shape_cast %24 : vector<1x16xf32> to vector<1x1x16xf32>
    %cst_14 = arith.constant 1.000000e+00 : f32
    %26 = vector.broadcast %cst_14 : f32 to vector<1x1x16xf32>
    %27 = arith.divf %26, %25 : vector<1x1x16xf32>
    %28 = vector.broadcast %27 : vector<1x1x16xf32> to vector<1x8x16xf32>
    %29 = arith.mulf %23, %28 : vector<1x8x16xf32>
    %cst_15 = arith.constant dense<0.000000e+00> : vector<1x16x32xf32>
    %30 = tpu.matmul %29, %0, %cst_15 {dimension_numbers = #tpu.dot_dimension_numbers<[1], [1], [2], [2], [0, 0, 0, 2, 1, 2], [0], [0]>} : vector<1x8x16xf32>, vector<1x8x32xf32>, vector<1x16x32xf32> -> vector<1x16x32xf32>
    %31 = arith.subf %1, %30 : vector<1x16x32xf32>
    %32 = arith.mulf %1, %30 : vector<1x16x32xf32>
    %33 = tpu.concatenate %1, %30, %31, %32 in 2 : vector<1x16x32xf32>, vector<1x16x32xf32>, vector<1x16x32xf32>, vector<1x16x32xf32> -> vector<1x16x128xf32>
    %c0_16 = arith.constant 0 : index
    %c0_17 = arith.constant 0 : index
    %c0_18 = arith.constant 0 : index
    %34 = vector.load %arg4[%c0_16, %c0_17, %c0_18] : memref<1x16x128xf32, #tpu.memory_space<vmem>>, vector<1x16x128xf32>
    tpu.vector_store %arg4[%c0_16, %c0_17, %c0_18], %33 {strides = array<i32>} : memref<1x16x128xf32, #tpu.memory_space<vmem>>, vector<1x16x128xf32>,
    return
  }
  func.func @transform_0(%arg0: i32) -> (i32, i32, i32) {
    %c0_i32 = arith.constant 0 : i32
    %c0_i32_0 = arith.constant 0 : i32
    %c0_i32_1 = arith.constant 0 : i32
    return %arg0, %c0_i32, %c0_i32_0 : i32, i32, i32
  }
  func.func @transform_1(%arg0: i32) -> (i32, i32, i32) {
    %c0_i32 = arith.constant 0 : i32
    %c0_i32_0 = arith.constant 0 : i32
    %c0_i32_1 = arith.constant 0 : i32
    return %arg0, %c0_i32, %c0_i32_0 : i32, i32, i32
  }
  func.func @transform_2(%arg0: i32) -> (i32, i32, i32) {
    %c0_i32 = arith.constant 0 : i32
    %c0_i32_0 = arith.constant 0 : i32
    %c0_i32_1 = arith.constant 0 : i32
    return %arg0, %c0_i32, %c0_i32_0 : i32, i32, i32
  }
  func.func @transform_3(%arg0: i32) -> (i32, i32, i32) {
    %c0_i32 = arith.constant 0 : i32
    %c0_i32_0 = arith.constant 0 : i32
    %c0_i32_1 = arith.constant 0 : i32
    return %arg0, %c0_i32, %c0_i32_0 : i32, i32, i32
  }
}

</mosaic_0001>

<llo_original>
// kernel: tpu_custom_call.1
$region0: #{tpu_custom_call.1}
  #allocation0 [shape = 'u32[]', space=smem, size = 0x4, offset = 0x4, fixed_abs, tag = 'smem constant byte address 0x4 - core index']
  #allocation1 [shape = 'u32[144,128]{1,0:T(1,128)}', space=vmem, size = 0x12000, scoped, tag = 'internal scratch']
  %s0 = inlined_call_operand.hbm [shape: f32[2,8,32], index: 0, kind: input, shape index: {}]
  %s1 = inlined_call_operand.hbm [shape: f32[2,16,32], index: 1, kind: input, shape index: {}]
  %s2 = inlined_call_operand.hbm [shape: f32[2,8,128], index: 2, kind: output, shape index: {0}]
  %s3 = inlined_call_operand.hbm [shape: f32[2,16,128], index: 3, kind: output, shape index: {1}]
  %4 = xla_tuple %s2, %s3
  %s5 = sld [smem:[#allocation0]]
  $region57: #{tpu_custom_call.1} parent=0
    _
  %s7 = ssub.s32 1, %s5
  %s8 = scalar_select 0, %s7, %s5
  $region1: #{tpu_custom_call.1} parent=0
    #allocation2 [shape = 'u8[8192]{0}', space=vmem, size = 0x2000, scoped, tag = 'input window, operand 0']
    #allocation3 [shape = 's32[2]{0}', space=sflag, size = 0x8, scoped, tag = 'scoped memory for tpu_custom_call.1']
    #allocation4 [shape = 's32[2]{0}', space=sflag, size = 0x8, scoped, tag = 'scoped memory for tpu_custom_call.1']
    #allocation5 [shape = 'u8[16384]{0}', space=vmem, size = 0x4000, scoped, tag = 'input window, operand 1']
    #allocation6 [shape = 's32[2]{0}', space=sflag, size = 0x8, scoped, tag = 'scoped memory for tpu_custom_call.1']
    #allocation7 [shape = 'u8[8192]{0}', space=vmem, size = 0x2000, scoped, tag = 'output window, operand 0']
    #allocation8 [shape = 'u8[16384]{0}', space=vmem, size = 0x4000, scoped, tag = 'output window, operand 1']
    #allocation9 [shape = 's32[2]{0}', space=sflag, size = 0x8, scoped, tag = 'scoped memory for tpu_custom_call.1']
    %9 = vsyncpa [#allocation3], 0
    %s10 = scalar_lea.sflag [#allocation3], 1
    %11 = vsyncpa %s10, 0
    %12 = vsyncpa [#allocation6], 0
    %s13 = scalar_lea.sflag [#allocation6], 1
    %14 = vsyncpa %s13, 0
    %15 = vsyncpa [#allocation4], 0
    %s16 = scalar_lea.sflag [#allocation4], 1
    %17 = vsyncpa %s16, 0
    %18 = vsyncpa [#allocation9], 0
    %s19 = scalar_lea.sflag [#allocation9], 1
    %20 = vsyncpa %s19, 0
    loop: start=0, step=1, limit=4
    $region2: #{tpu_custom_call.1} parent=1 // loop_pre_header
      _
    $region3: #{tpu_custom_call.1} parent=1 // loop_header
      %s22 = sphi 0, %s26
      %p23 = scmp.ge.s32.totalorder %s22, 4
      %s32 = sphi 0, %s34
      %s35 = sphi 0, %s32
      %s36 = sphi 0, %s35
      %s52 = sphi 0, %s36
      %s58 = sphi 0, %s60
      %s61 = sphi 0, %s58
      %s62 = sphi 0, %s61
      %s78 = sphi 0, %s62
      %s84 = sphi 0, %s86
      %s87 = sphi 0, %s84
      %s88 = sphi 0, %s87
      %s104 = sphi 0, %s88
      %s110 = sphi 0, %s112
      %s113 = sphi 0, %s110
      %s114 = sphi 0, %s113
      %s130 = sphi 0, %s114
    $region4: #{tpu_custom_call.1} parent=1 // loop_header_branch
      %25 = sbr.rel (%p23) target = $region8
    $region5: #{tpu_custom_call.1} parent=1 // loop_body
      %s27 = ssub.s32 %s22, 1
      %s28 = ssub.s32 %s22, 2
      %s29 = sadd.s32 %s22, 1
      %s30 = ssub.s32 %s22, %s29
      %p31 = scmp.eq.s32.totalorder %s30, 0
      %s33 = sadd.s32 %s32, 1
      %s34 = scalar_select %p31, %s32, %s33
      %p37 = pneg %p31
      %p38 = scmp.eq.s32.totalorder %s22, 1
      %p39 = por %p37, %p38
      %p40 = scmp.ne.s32.totalorder %s32, %s35
      %p41 = scmp.eq.s32.totalorder %s22, 0
      %p42 = por %p40, %p41
      %p43 = scmp.ne.s32.totalorder %s32, %s35
      %p44 = scmp.eq.s32.totalorder %s27, 1
      %p45 = por %p43, %p44
      %p46 = scmp.ne.s32.totalorder %s35, %s36
      %p47 = scmp.eq.s32.totalorder %s27, 0
      %p48 = por %p46, %p47
      %p49 = scmp.ne.s32.totalorder %s35, %s36
      %p50 = scmp.eq.s32.totalorder %s28, 1
      %p51 = por %p49, %p50
      %p53 = scmp.ne.s32.totalorder %s36, %s52
      %p54 = scmp.eq.s32.totalorder %s28, 0
      %p55 = por %p53, %p54
      %s56 = ssub.s32 %s22, %s29
      %p57 = scmp.eq.s32.totalorder %s56, 0
      %s59 = sadd.s32 %s58, 1
      %s60 = scalar_select %p57, %s58, %s59
      %p63 = pneg %p57
      %p64 = scmp.eq.s32.totalorder %s22, 1
      %p65 = por %p63, %p64
      %p66 = scmp.ne.s32.totalorder %s58, %s61
      %p67 = scmp.eq.s32.totalorder %s22, 0
      %p68 = por %p66, %p67
      %p69 = scmp.ne.s32.totalorder %s58, %s61
      %p70 = scmp.eq.s32.totalorder %s27, 1
      %p71 = por %p69, %p70
      %p72 = scmp.ne.s32.totalorder %s61, %s62
      %p73 = scmp.eq.s32.totalorder %s27, 0
      %p74 = por %p72, %p73
      %p75 = scmp.ne.s32.totalorder %s61, %s62
      %p76 = scmp.eq.s32.totalorder %s28, 1
      %p77 = por %p75, %p76
      %p79 = scmp.ne.s32.totalorder %s62, %s78
      %p80 = scmp.eq.s32.totalorder %s28, 0
      %p81 = por %p79, %p80
      %s82 = ssub.s32 %s22, %s29
      %p83 = scmp.eq.s32.totalorder %s82, 0
      %s85 = sadd.s32 %s84, 1
      %s86 = scalar_select %p83, %s84, %s85
      %p89 = pneg %p83
      %p90 = scmp.eq.s32.totalorder %s22, 1
      %p91 = por %p89, %p90
      %p92 = scmp.ne.s32.totalorder %s84, %s87
      %p93 = scmp.eq.s32.totalorder %s22, 0
      %p94 = por %p92, %p93
      %p95 = scmp.ne.s32.totalorder %s84, %s87
      %p96 = scmp.eq.s32.totalorder %s27, 1
      %p97 = por %p95, %p96
      %p98 = scmp.ne.s32.totalorder %s87, %s88
      %p99 = scmp.eq.s32.totalorder %s27, 0
      %p100 = por %p98, %p99
      %p101 = scmp.ne.s32.totalorder %s87, %s88
      %p102 = scmp.eq.s32.totalorder %s28, 1
      %p103 = por %p101, %p102
      %p105 = scmp.ne.s32.totalorder %s88, %s104
      %p106 = scmp.eq.s32.totalorder %s28, 0
      %p107 = por %p105, %p106
      %s108 = ssub.s32 %s22, %s29
      %p109 = scmp.eq.s32.totalorder %s108, 0
      %s111 = sadd.s32 %s110, 1
      %s112 = scalar_select %p109, %s110, %s111
      %p115 = pneg %p109
      %p116 = scmp.eq.s32.totalorder %s22, 1
      %p117 = por %p115, %p116
      %p118 = scmp.ne.s32.totalorder %s110, %s113
      %p119 = scmp.eq.s32.totalorder %s22, 0
      %p120 = por %p118, %p119
      %p121 = scmp.ne.s32.totalorder %s110, %s113
      %p122 = scmp.eq.s32.totalorder %s27, 1
      %p123 = por %p121, %p122
      %p124 = scmp.ne.s32.totalorder %s113, %s114
      %p125 = scmp.eq.s32.totalorder %s27, 0
      %p126 = por %p124, %p125
      %p127 = scmp.ne.s32.totalorder %s113, %s114
      %p128 = scmp.eq.s32.totalorder %s28, 1
      %p129 = por %p127, %p128
      %p131 = scmp.ne.s32.totalorder %s114, %s130
      %p132 = scmp.eq.s32.totalorder %s28, 0
      %p133 = por %p131, %p132
      %p134 = scmp.le.s32.totalorder 1, %s22
      %p135 = scmp.lt.s32.totalorder %s22, 3
      %p136 = pnand %p134, %p135
      %p137 = pneg %p136
      // Predicated region
      $region9: #{tpu_custom_call.1} parent=5 // pred_check
        _
      $region10: #{tpu_custom_call.1} parent=5 // pred_check_branch
        %139 = sbr.rel (%p136) target = $region12
      $region11: #{tpu_custom_call.1} parent=5 // pred_region
        %s140 = ssub.s32 %s22, 1
      $region12: #{tpu_custom_call.1} parent=5 // pred_fallthru
        _
      %p141 = scmp.lt.s32.totalorder %s22, 2
      // Predicated region
      $region13: #{tpu_custom_call.1} parent=5 // pred_check
        %p142 = pneg %p141
      $region14: #{tpu_custom_call.1} parent=5 // pred_check_branch
        %144 = sbr.rel (%p142) target = $region16
      $region15: #{tpu_custom_call.1} parent=5 // pred_region
        // Predicated region
        $region17: #{tpu_custom_call.1} parent=15 // pred_check
          %p145 = pneg %p42
        $region18: #{tpu_custom_call.1} parent=15 // pred_check_branch
          %147 = sbr.rel (%p145) target = $region20
        $region19: #{tpu_custom_call.1} parent=15 // pred_region
          %s148 = sand.u32 %s32, 1
          %s149 = scalar_lea.sflag [#allocation3], %s148
          %s150 = sand.u32 %s32, 1
          %s151 = smul.addr %s150, 8
          %s152 = scalar_lea.vmem [#allocation2], %s151
          %s154 = ssub.s32 128, 128
          %155 = vsyncadd %s149, %s154
          %s156 = smul.addr %s22, 128
          %s157 = scalar_lea.hbm %s0, %s156
          %s159 = sshll.u32 %s152, 4
          %s160 = int_to_ptr.vmem [resolvable:$true] %s159
          %162 = dma.hbm_to_vmem [thread:$0]  %s157, 128, %s160, %s149
        $region20: #{tpu_custom_call.1} parent=15 // pred_fallthru
          _
        // Predicated region
        $region21: #{tpu_custom_call.1} parent=15 // pred_check
          %p163 = pneg %p68
        $region22: #{tpu_custom_call.1} parent=15 // pred_check_branch
          %165 = sbr.rel (%p163) target = $region24
        $region23: #{tpu_custom_call.1} parent=15 // pred_region
          %s166 = sand.u32 %s58, 1
          %s167 = scalar_lea.sflag [#allocation6], %s166
          %s168 = sand.u32 %s58, 1
          %s169 = smul.addr %s168, 16
          %s170 = scalar_lea.vmem [#allocation5], %s169
          %s172 = ssub.s32 256, 256
          %173 = vsyncadd %s167, %s172
          %s174 = smul.addr %s22, 2
          %s175 = smul.addr %s174, 128
          %s176 = scalar_lea.hbm %s1, %s175
          %s177 = sshll.u32 %s170, 4
          %s178 = int_to_ptr.vmem [resolvable:$true] %s177
          %183 = dma.hbm_to_vmem [thread:$0]  %s176, 256, %s178, %s167, 128, 128, 8
        $region24: #{tpu_custom_call.1} parent=15 // pred_fallthru
          _
      $region16: #{tpu_custom_call.1} parent=5 // pred_fallthru
        _
      %p184 = scmp.le.s32.totalorder 1, %s22
      %p185 = scmp.lt.s32.totalorder %s22, 3
      %p186 = pnand %p184, %p185
      %p187 = pneg %p186
      // Predicated region
      $region25: #{tpu_custom_call.1} parent=5 // pred_check
        _
      $region26: #{tpu_custom_call.1} parent=5 // pred_check_branch
        %189 = sbr.rel (%p186) target = $region28
      $region27: #{tpu_custom_call.1} parent=5 // pred_region
        %s190 = ssub.s32 %s22, 1
        %s191 = sand.u32 %s35, 1
        %s192 = scalar_lea.sflag [#allocation3], %s191
        %s193 = sand.u32 %s35, 1
        %s194 = smul.addr %s193, 8
        %s195 = scalar_lea.vmem [#allocation2], %s194
        // Predicated region
        $region29: #{tpu_custom_call.1} parent=27 // pred_check
          %p196 = pneg %p48
        $region30: #{tpu_custom_call.1} parent=27 // pred_check_branch
          %198 = sbr.rel (%p196) target = $region32
        $region31: #{tpu_custom_call.1} parent=27 // pred_region
          %199 = dma.done %s192, 128
        $region32: #{tpu_custom_call.1} parent=27 // pred_fallthru
          _
        %s200 = sand.u32 %s61, 1
        %s201 = scalar_lea.sflag [#allocation6], %s200
        %s202 = sand.u32 %s61, 1
        %s203 = smul.addr %s202, 16
        %s204 = scalar_lea.vmem [#allocation5], %s203
        // Predicated region
        $region33: #{tpu_custom_call.1} parent=27 // pred_check
          %p205 = pneg %p74
        $region34: #{tpu_custom_call.1} parent=27 // pred_check_branch
          %207 = sbr.rel (%p205) target = $region36
        $region35: #{tpu_custom_call.1} parent=27 // pred_region
          %208 = dma.done %s201, 256
        $region36: #{tpu_custom_call.1} parent=27 // pred_fallthru
          _
        %s209 = sand.u32 %s35, 1
        %s210 = scalar_lea.sflag [#allocation3], %s209
        %s211 = sand.u32 %s35, 1
        %s212 = smul.addr %s211, 8
        %s213 = scalar_lea.vmem [#allocation2], %s212
        %p214 = pneg %p48
        %p215 = pneg %p45
        %s216 = sand.u32 %s61, 1
        %s217 = scalar_lea.sflag [#allocation6], %s216
        %s218 = sand.u32 %s61, 1
        %s219 = smul.addr %s218, 16
        %s220 = scalar_lea.vmem [#allocation5], %s219
        %p221 = pneg %p74
        %p222 = pneg %p71
        %p223 = pneg %p100
        %p224 = pneg %p97
        %s225 = sand.u32 %s87, 1
        %s226 = scalar_lea.sflag [#allocation4], %s225
        %s227 = sand.u32 %s87, 1
        %s228 = smul.addr %s227, 8
        %s229 = scalar_lea.vmem [#allocation7], %s228
        %p230 = pneg %p126
        %p231 = pneg %p123
        %s232 = sand.u32 %s113, 1
        %s233 = scalar_lea.sflag [#allocation9], %s232
        %s234 = sand.u32 %s113, 1
        %s235 = smul.addr %s234, 16
        %s236 = scalar_lea.vmem [#allocation8], %s235
        %v237 = vld [vmem:[%s195] sm:$0xff]
        %v238 = vld [vmem:[%s204] sm:$0xff]
        %v239 = vld [vmem:[%s204 + $0x8] sm:$0xff]
        %vm240 = vcmask 261120
        %v242 = vsel %vm240, %v237, 0
        %v245 = vsel %vm240, %v238, 0
        %v248 = vsel %vm240, %v239, 0
        %250 = vmatprep.subr.mxu0 0.0
        %251 = vmatpush1.xpose.msra.mxu0 %v245
        %252 = vmatprep.subr.mxu0 0.0
        %253 = vmatpush1.xpose.msra.mxu0 %v248
        %254 = vmatprep.subr.mxu0 0.0
        %255 = vmatpush1.xpose.msra.mxu0 0.0
        %256 = vmatprep.subr.mxu0 0.0
        %257 = vmatpush1.xpose.msra.mxu0 0.0
        %258 = vmatprep.subr.mxu0 0.0
        %259 = vmatpush1.xpose.msra.mxu0 0.0
        %260 = vmatprep.subr.mxu0 0.0
        %261 = vmatpush1.xpose.msra.mxu0 0.0
        %262 = vmatprep.subr.mxu0 0.0
        %263 = vmatpush1.xpose.msra.mxu0 0.0
        %264 = vmatprep.subr.mxu0 0.0
        %265 = vmatpush1.xpose.msra.mxu0 0.0
        %266 = vmatprep.subr.mxu0 0.0
        %267 = vmatpush1.xpose.msra.mxu0 0.0
        %268 = vmatprep.subr.mxu0 0.0
        %269 = vmatpush1.xpose.msra.mxu0 0.0
        %270 = vmatprep.subr.mxu0 0.0
        %271 = vmatpush1.xpose.msra.mxu0 0.0
        %272 = vmatprep.subr.mxu0 0.0
        %273 = vmatpush1.xpose.msra.mxu0 0.0
        %274 = vmatprep.subr.mxu0 0.0
        %275 = vmatpush1.xpose.msra.mxu0 0.0
        %276 = vmatprep.subr.mxu0 0.0
        %277 = vmatpush1.xpose.msra.mxu0 0.0
        %278 = vmatprep.subr.mxu0 0.0
        %279 = vmatpush1.xpose.msra.mxu0 0.0
        %280 = vmatprep.subr.mxu0 0.0
        %281 = vmatpush1.xpose.msra.mxu0 0.0
        %282 = vmatprep.subr.mxu0 0.0
        %283 = vmatpush1.xpose.msra.mxu0 0.0
        %284 = vmatprep.subr.mxu0 0.0
        %285 = vmatpush1.xpose.msra.mxu0 0.0
        %286 = vmatprep.subr.mxu0 0.0
        %287 = vmatpush1.xpose.msra.mxu0 0.0
        %288 = vmatprep.subr.mxu0 0.0
        %289 = vmatpush1.xpose.msra.mxu0 0.0
        %290 = vmatprep.subr.mxu0 0.0
        %291 = vmatpush1.xpose.msra.mxu0 0.0
        %292 = vmatprep.subr.mxu0 0.0
        %293 = vmatpush1.xpose.msra.mxu0 0.0
        %294 = vmatprep.subr.mxu0 0.0
        %295 = vmatpush1.xpose.msra.mxu0 0.0
        %296 = vmatprep.subr.mxu0 0.0
        %297 = vmatpush1.xpose.msra.mxu0 0.0
        %298 = vmatprep.subr.mxu0 0.0
        %299 = vmatpush1.xpose.msra.mxu0 0.0
        %300 = vmatprep.subr.mxu0 0.0
        %301 = vmatpush1.xpose.msra.mxu0 0.0
        %302 = vmatprep.subr.mxu0 0.0
        %303 = vmatpush1.xpose.msra.mxu0 0.0
        %304 = vmatprep.subr.mxu0 0.0
        %305 = vmatpush1.xpose.msra.mxu0 0.0
        %306 = vmatprep.subr.mxu0 0.0
        %307 = vmatpush1.xpose.msra.mxu0 0.0
        %308 = vmatprep.subr.mxu0 0.0
        %309 = vmatpush1.xpose.msra.mxu0 0.0
        %310 = vmatprep.subr.mxu0 0.0
        %311 = vmatpush1.xpose.msra.mxu0 0.0
        %312 = vmatprep.subr.mxu0 0.0
        %313 = vmatpush1.xpose.msra.mxu0 0.0
        %314 = vmatprep.mubr.f32.mxu0 0.0
        %315 = vmatmul.mubr.f32.gmra.mrb[0].mxu0 %v242
        %v316 = vpop.f32.mrb[0].mxu0
        %v317 = vadd.f32 0.0, %v316
        %v318 = vpop.f32.mrb[0].mxu0
        %319 = vdwg.mxu0
        %vm320 = vcmask 130048
        %v321 = vsel %vm320, %v317, -inf
        %322 = vmax.xlane.f32.xlu0 %v321
        %v323 = vpop.xlane.xlu0 %322
        %v324 = vsub.f32 %v317, %v323
        %v325 = vmul.f32 %v324, 1.442695
        %v326 = vpow.pop %v325
        %v327 = vsel %vm320, %v326, 0.0
        %328 = vadd.xlane.f32.xlu0 %v327
        %v329 = vpop.xlane.xlu0 %328
        %v331 = vsel %vm320, %v326, 0
        %333 = vmatprep.subr.mxu0 0.0
        %334 = vmatpush1.msra.mxu0 %v238
        %335 = vmatprep.subr.mxu0 0.0
        %336 = vmatpush1.msra.mxu0 %v239
        %337 = vmatprep.subr.mxu0 0.0
        %338 = vmatpush1.msra.mxu0 0.0
        %339 = vmatprep.subr.mxu0 0.0
        %340 = vmatpush1.msra.mxu0 0.0
        %341 = vmatprep.subr.mxu0 0.0
        %342 = vmatpush1.msra.mxu0 0.0
        %343 = vmatprep.subr.mxu0 0.0
        %344 = vmatpush1.msra.mxu0 0.0
        %345 = vmatprep.subr.mxu0 0.0
        %346 = vmatpush1.msra.mxu0 0.0
        %347 = vmatprep.subr.mxu0 0.0
        %348 = vmatpush1.msra.mxu0 0.0
        %349 = vmatprep.subr.mxu0 0.0
        %350 = vmatpush1.msra.mxu0 0.0
        %351 = vmatprep.subr.mxu0 0.0
        %352 = vmatpush1.msra.mxu0 0.0
        %353 = vmatprep.subr.mxu0 0.0
        %354 = vmatpush1.msra.mxu0 0.0
        %355 = vmatprep.subr.mxu0 0.0
        %356 = vmatpush1.msra.mxu0 0.0
        %357 = vmatprep.subr.mxu0 0.0
        %358 = vmatpush1.msra.mxu0 0.0
        %359 = vmatprep.subr.mxu0 0.0
        %360 = vmatpush1.msra.mxu0 0.0
        %361 = vmatprep.subr.mxu0 0.0
        %362 = vmatpush1.msra.mxu0 0.0
        %363 = vmatprep.subr.mxu0 0.0
        %364 = vmatpush1.msra.mxu0 0.0
        %365 = vmatprep.subr.mxu0 0.0
        %366 = vmatpush1.msra.mxu0 0.0
        %367 = vmatprep.subr.mxu0 0.0
        %368 = vmatpush1.msra.mxu0 0.0
        %369 = vmatprep.subr.mxu0 0.0
        %370 = vmatpush1.msra.mxu0 0.0
        %371 = vmatprep.subr.mxu0 0.0
        %372 = vmatpush1.msra.mxu0 0.0
        %373 = vmatprep.subr.mxu0 0.0
        %374 = vmatpush1.msra.mxu0 0.0
        %375 = vmatprep.subr.mxu0 0.0
        %376 = vmatpush1.msra.mxu0 0.0
        %377 = vmatprep.subr.mxu0 0.0
        %378 = vmatpush1.msra.mxu0 0.0
        %379 = vmatprep.subr.mxu0 0.0
        %380 = vmatpush1.msra.mxu0 0.0
        %381 = vmatprep.subr.mxu0 0.0
        %382 = vmatpush1.msra.mxu0 0.0
        %383 = vmatprep.subr.mxu0 0.0
        %384 = vmatpush1.msra.mxu0 0.0
        %385 = vmatprep.subr.mxu0 0.0
        %386 = vmatpush1.msra.mxu0 0.0
        %387 = vmatprep.subr.mxu0 0.0
        %388 = vmatpush1.msra.mxu0 0.0
        %389 = vmatprep.subr.mxu0 0.0
        %390 = vmatpush1.msra.mxu0 0.0
        %391 = vmatprep.subr.mxu0 0.0
        %392 = vmatpush1.msra.mxu0 0.0
        %393 = vmatprep.subr.mxu0 0.0
        %394 = vmatpush1.msra.mxu0 0.0
        %395 = vmatprep.subr.mxu0 0.0
        %396 = vmatpush1.msra.mxu0 0.0
        %397 = vmatprep.mubr.f32.mxu0 0.0
        %398 = vmatmul.mubr.f32.gmra.mrb[0].mxu0 %v331
        %v399 = vpop.f32.mrb[0].mxu0
        %v400 = vadd.f32 0.0, %v399
        %v401 = vpop.f32.mrb[0].mxu0
        %402 = vdwg.mxu0
        %v403 = vrcp.pop %v329
        %v404 = vmul.f32 1.0, %v403
        %v405 = vmul.f32 %v400, %v404
        %v406 = vsub.f32 %v237, %v405
        %v407 = vmul.f32 %v237, %v405
        %409 = vrot.lane.b32.xlu0 %v405, 32
        %v410 = vpop.permute.xlu0 %409
        %413 = vrot.lane.b32.xlu0 %v406, 64
        %v414 = vpop.permute.xlu0 %413
        %417 = vrot.lane.b32.xlu0 %v407, 96
        %v418 = vpop.permute.xlu0 %417
        %v420 = vsel %vm240, %v237, %v410
        %vm421 = vcmask 523264
        %v422 = vsel %vm421, %v420, %v414
        %vm423 = vcmask 785408
        %v424 = vsel %vm423, %v422, %v418
        %425 = vst [vmem:[%s229] sm:$0xff] %v424
        %v426 = vrot.slane %v321, 4
        %v427 = vmax.f32 %v321, %v426
        %v428 = vrot.slane %v427, 2
        %v429 = vmax.f32 %v427, %v428
        %v430 = vrot.slane %v429, 1
        %v431 = vmax.f32 %v429, %v430
        %v432 = vsub.f32 %v317, %v431
        %v433 = vmul.f32 %v432, 1.442695
        %v434 = vpow.pop %v433
        %v435 = vsel %vm320, %v434, 0.0
        %v436 = vrot.slane %v435, 4
        %v437 = vadd.f32 %v435, %v436
        %v438 = vrot.slane %v437, 2
        %v439 = vadd.f32 %v437, %v438
        %v440 = vrot.slane %v439, 1
        %v441 = vadd.f32 %v439, %v440
        %v442 = vrcp.pop %v441
        %v443 = vmul.f32 1.0, %v442
        %v444 = vmul.f32 %v434, %v443
        %445 = vxpose.xlu0.b32.start [1/16] %v444, 128
        %446 = vxpose.xlu0.b32.cont [2/16] 0.0, 128
        %447 = vxpose.xlu0.b32.cont [3/16] 0.0, 128
        %448 = vxpose.xlu0.b32.cont [4/16] 0.0, 128
        %449 = vxpose.xlu0.b32.cont [5/16] 0.0, 128
        %450 = vxpose.xlu0.b32.cont [6/16] 0.0, 128
        %451 = vxpose.xlu0.b32.cont [7/16] 0.0, 128
        %452 = vxpose.xlu0.b32.cont [8/16] 0.0, 128
        %453 = vxpose.xlu0.b32.cont [9/16] 0.0, 128
        %454 = vxpose.xlu0.b32.cont [10/16] 0.0, 128
        %455 = vxpose.xlu0.b32.cont [11/16] 0.0, 128
        %456 = vxpose.xlu0.b32.cont [12/16] 0.0, 128
        %457 = vxpose.xlu0.b32.cont [13/16] 0.0, 128
        %458 = vxpose.xlu0.b32.cont [14/16] 0.0, 128
        %459 = vxpose.xlu0.b32.cont [15/16] 0.0, 128
        %460 = vxpose.xlu0.b32.end [16/16] 0.0, 128
        %v461 = vpop.trf.xlu0
        %v462 = vpop.trf.xlu0
        %v463 = vpop.trf.xlu0
        %v464 = vpop.trf.xlu0
        %v465 = vpop.trf.xlu0
        %v466 = vpop.trf.xlu0
        %v467 = vpop.trf.xlu0
        %v468 = vpop.trf.xlu0
        %v469 = vpop.trf.xlu0
        %v470 = vpop.trf.xlu0
        %v471 = vpop.trf.xlu0
        %v472 = vpop.trf.xlu0
        %v473 = vpop.trf.xlu0
        %v474 = vpop.trf.xlu0
        %v475 = vpop.trf.xlu0
        %v476 = vpop.trf.xlu0
        %vm477 = vcmask 64512
        %v479 = vsel %vm477, %v461, 0
        %v482 = vsel %vm477, %v462, 0
        %484 = vmatprep.subr.mxu0 0.0
        %485 = vmatpush1.msra.mxu0 %v237
        %486 = vmatprep.subr.mxu0 0.0
        %487 = vmatpush1.msra.mxu0 0.0
        %488 = vmatprep.subr.mxu0 0.0
        %489 = vmatpush1.msra.mxu0 0.0
        %490 = vmatprep.subr.mxu0 0.0
        %491 = vmatpush1.msra.mxu0 0.0
        %492 = vmatprep.subr.mxu0 0.0
        %493 = vmatpush1.msra.mxu0 0.0
        %494 = vmatprep.subr.mxu0 0.0
        %495 = vmatpush1.msra.mxu0 0.0
        %496 = vmatprep.subr.mxu0 0.0
        %497 = vmatpush1.msra.mxu0 0.0
        %498 = vmatprep.subr.mxu0 0.0
        %499 = vmatpush1.msra.mxu0 0.0
        %500 = vmatprep.subr.mxu0 0.0
        %501 = vmatpush1.msra.mxu0 0.0
        %502 = vmatprep.subr.mxu0 0.0
        %503 = vmatpush1.msra.mxu0 0.0
        %504 = vmatprep.subr.mxu0 0.0
        %505 = vmatpush1.msra.mxu0 0.0
        %506 = vmatprep.subr.mxu0 0.0
        %507 = vmatpush1.msra.mxu0 0.0
        %508 = vmatprep.subr.mxu0 0.0
        %509 = vmatpush1.msra.mxu0 0.0
        %510 = vmatprep.subr.mxu0 0.0
        %511 = vmatpush1.msra.mxu0 0.0
        %512 = vmatprep.subr.mxu0 0.0
        %513 = vmatpush1.msra.mxu0 0.0
        %514 = vmatprep.subr.mxu0 0.0
        %515 = vmatpush1.msra.mxu0 0.0
        %516 = vmatprep.subr.mxu0 0.0
        %517 = vmatpush1.msra.mxu0 0.0
        %518 = vmatprep.subr.mxu0 0.0
        %519 = vmatpush1.msra.mxu0 0.0
        %520 = vmatprep.subr.mxu0 0.0
        %521 = vmatpush1.msra.mxu0 0.0
        %522 = vmatprep.subr.mxu0 0.0
        %523 = vmatpush1.msra.mxu0 0.0
        %524 = vmatprep.subr.mxu0 0.0
        %525 = vmatpush1.msra.mxu0 0.0
        %526 = vmatprep.subr.mxu0 0.0
        %527 = vmatpush1.msra.mxu0 0.0
        %528 = vmatprep.subr.mxu0 0.0
        %529 = vmatpush1.msra.mxu0 0.0
        %530 = vmatprep.subr.mxu0 0.0
        %531 = vmatpush1.msra.mxu0 0.0
        %532 = vmatprep.subr.mxu0 0.0
        %533 = vmatpush1.msra.mxu0 0.0
        %534 = vmatprep.subr.mxu0 0.0
        %535 = vmatpush1.msra.mxu0 0.0
        %536 = vmatprep.subr.mxu0 0.0
        %537 = vmatpush1.msra.mxu0 0.0
        %538 = vmatprep.subr.mxu0 0.0
        %539 = vmatpush1.msra.mxu0 0.0
        %540 = vmatprep.subr.mxu0 0.0
        %541 = vmatpush1.msra.mxu0 0.0
        %542 = vmatprep.subr.mxu0 0.0
        %543 = vmatpush1.msra.mxu0 0.0
        %544 = vmatprep.subr.mxu0 0.0
        %545 = vmatpush1.msra.mxu0 0.0
        %546 = vmatprep.subr.mxu0 0.0
        %547 = vmatpush1.msra.mxu0 0.0
        %548 = vmatprep.mubr.f32.mxu0 0.0
        %549 = vmatmul.mubr.f32.gmra.mrb[0].mxu0 %v479
        %v550 = vpop.f32.mrb[0].mxu0
        %v551 = vadd.f32 0.0, %v550
        %v552 = vpop.f32.mrb[0].mxu0
        %553 = vmatprep.mubr.f32.mxu0 0.0
        %554 = vmatmul.mubr.f32.gmra.mrb[0].mxu0 %v482
        %v555 = vpop.f32.mrb[0].mxu0
        %v556 = vadd.f32 0.0, %v555
        %v557 = vpop.f32.mrb[0].mxu0
        %558 = vdwg.mxu0
        %v559 = vsub.f32 %v238, %v551
        %v560 = vsub.f32 %v239, %v556
        %v561 = vmul.f32 %v238, %v551
        %v562 = vmul.f32 %v239, %v556
        %565 = vrot.lane.b32.xlu0 %v551, 32
        %v566 = vpop.permute.xlu0 %565
        %567 = vrot.lane.b32.xlu0 %v556, 32
        %v568 = vpop.permute.xlu0 %567
        %573 = vrot.lane.b32.xlu0 %v559, 64
        %v574 = vpop.permute.xlu0 %573
        %575 = vrot.lane.b32.xlu0 %v560, 64
        %v576 = vpop.permute.xlu0 %575
        %581 = vrot.lane.b32.xlu0 %v561, 96
        %v582 = vpop.permute.xlu0 %581
        %583 = vrot.lane.b32.xlu0 %v562, 96
        %v584 = vpop.permute.xlu0 %583
        %v587 = vsel %vm240, %v238, %v566
        %v588 = vsel %vm240, %v239, %v568
        %v589 = vsel %vm421, %v587, %v574
        %v590 = vsel %vm421, %v588, %v576
        %v591 = vsel %vm423, %v589, %v582
        %v592 = vsel %vm423, %v590, %v584
        %593 = vst [vmem:[%s236] sm:$0xff] %v591
        %594 = vst [vmem:[%s236 + $0x8] sm:$0xff] %v592
        %s595 = sand.u32 %s87, 1
        %s596 = scalar_lea.sflag [#allocation4], %s595
        %s597 = sand.u32 %s87, 1
        %s598 = smul.addr %s597, 8
        %s599 = scalar_lea.vmem [#allocation7], %s598
        %s600 = sand.u32 %s113, 1
        %s601 = scalar_lea.sflag [#allocation9], %s600
        %s602 = sand.u32 %s113, 1
        %s603 = smul.addr %s602, 16
        %s604 = scalar_lea.vmem [#allocation8], %s603
        // Predicated region
        $region37: #{tpu_custom_call.1} parent=27 // pred_check
          %p605 = pneg %p97
        $region38: #{tpu_custom_call.1} parent=27 // pred_check_branch
          %607 = sbr.rel (%p605) target = $region40
        $region39: #{tpu_custom_call.1} parent=27 // pred_region
          %s609 = ssub.s32 128, 128
          %610 = vsyncadd %s596, %s609
          %s611 = smul.addr %s27, 128
          %s612 = scalar_lea.hbm %s2, %s611
          %s614 = sshll.u32 %s599, 4
          %s615 = int_to_ptr.vmem [resolvable:$true] %s614
          %617 = dma.vmem_to_hbm [thread:$0]  %s615, 128, %s612, %s596
        $region40: #{tpu_custom_call.1} parent=27 // pred_fallthru
          _
        // Predicated region
        $region41: #{tpu_custom_call.1} parent=27 // pred_check
          %p618 = pneg %p123
        $region42: #{tpu_custom_call.1} parent=27 // pred_check_branch
          %620 = sbr.rel (%p618) target = $region44
        $region43: #{tpu_custom_call.1} parent=27 // pred_region
          %s622 = ssub.s32 256, 256
          %623 = vsyncadd %s601, %s622
          %s624 = smul.addr %s27, 2
          %s625 = smul.addr %s624, 128
          %s626 = scalar_lea.hbm %s3, %s625
          %s627 = sshll.u32 %s604, 4
          %s628 = int_to_ptr.vmem [resolvable:$true] %s627
          %633 = dma.vmem_to_hbm [thread:$0]  %s628, 256, %s626, %s601, 128, 128, 8
        $region44: #{tpu_custom_call.1} parent=27 // pred_fallthru
          _
      $region28: #{tpu_custom_call.1} parent=5 // pred_fallthru
        _
      %p634 = scmp.le.s32.totalorder 2, %s22
      // Predicated region
      $region45: #{tpu_custom_call.1} parent=5 // pred_check
        %p635 = pneg %p634
      $region46: #{tpu_custom_call.1} parent=5 // pred_check_branch
        %637 = sbr.rel (%p635) target = $region48
      $region47: #{tpu_custom_call.1} parent=5 // pred_region
        %s638 = ssub.s32 %s22, 2
        // Predicated region
        $region49: #{tpu_custom_call.1} parent=47 // pred_check
          %p639 = pneg %p103
        $region50: #{tpu_custom_call.1} parent=47 // pred_check_branch
          %641 = sbr.rel (%p639) target = $region52
        $region51: #{tpu_custom_call.1} parent=47 // pred_region
          %s642 = sand.u32 %s88, 1
          %s643 = scalar_lea.sflag [#allocation4], %s642
          %s644 = sand.u32 %s88, 1
          %s645 = smul.addr %s644, 8
          %s646 = scalar_lea.vmem [#allocation7], %s645
          %647 = dma.done %s643, 128
        $region52: #{tpu_custom_call.1} parent=47 // pred_fallthru
          _
        // Predicated region
        $region53: #{tpu_custom_call.1} parent=47 // pred_check
          %p648 = pneg %p129
        $region54: #{tpu_custom_call.1} parent=47 // pred_check_branch
          %650 = sbr.rel (%p648) target = $region56
        $region55: #{tpu_custom_call.1} parent=47 // pred_region
          %s651 = sand.u32 %s114, 1
          %s652 = scalar_lea.sflag [#allocation9], %s651
          %s653 = sand.u32 %s114, 1
          %s654 = smul.addr %s653, 16
          %s655 = scalar_lea.vmem [#allocation8], %s654
          %656 = dma.done %s652, 256
        $region56: #{tpu_custom_call.1} parent=47 // pred_fallthru
          _
      $region48: #{tpu_custom_call.1} parent=5 // pred_fallthru
        _
    $region6: #{tpu_custom_call.1} parent=1 // loop_footer
      %s26 = sadd.s32 1, %s22
    $region7: #{tpu_custom_call.1} parent=1 // loop_footer_branch
      %21 = sbr.rel target = $region3
    $region8: #{tpu_custom_call.1} parent=1 // loop_exit
      _
    %657 = vsyncpa [#allocation3], 1
    %s658 = scalar_lea.sflag [#allocation3], 1
    %659 = vsyncpa %s658, 1
    %660 = vsyncpa [#allocation6], 1
    %s661 = scalar_lea.sflag [#allocation6], 1
    %662 = vsyncpa %s661, 1
    %663 = vsyncpa [#allocation4], 1
    %s664 = scalar_lea.sflag [#allocation4], 1
    %665 = vsyncpa %s664, 1
    %666 = vsyncpa [#allocation9], 1
    %s667 = scalar_lea.sflag [#allocation9], 1
    %668 = vsyncpa %s667, 1

</llo_original>
